<compile_context>
chip_gen: v7x
topology: tpu7x:2x2x1
jax: 0.10.0
libtpu: 0.0.40
codegen_flags: <defaults>
</compile_context>

<pallas_src>
import math

import jax
import jax.numpy as jnp
from jax import lax
from jax.experimental import pallas as pl
from jax.experimental.pallas import tpu as pltpu


# --------------------------------------------------------------------------------------
# Kernel
# --------------------------------------------------------------------------------------
def temporal_conv1d_kernel(x_ref, w1_ref, b1_ref, w2_ref, b2_ref, nmask_ref,
                           o_ref, xs_ref, hs_ref):
    cip = x_ref.shape[0]
    cop = o_ref.shape[0]
    tile = x_ref.shape[1]

    x = x_ref[...]                                            # (Cip, TILE) compute dtype

    # --- conv1 (k=3, pad=1): stack [x[t-1]; x[t]; x[t+1]] on sublanes, ONE MXU matmul ---
    xs_ref[0:cip, :] = pltpu.roll(x, shift=1, axis=1)         # x[t-1]; wrap hits gap col
    xs_ref[cip:2 * cip, :] = x                                # x[t]
    xs_ref[2 * cip:3 * cip, :] = pltpu.roll(x, shift=tile - 1, axis=1)   # x[t+1]
    h = jnp.dot(w1_ref[...], xs_ref[...], preferred_element_type=jnp.float32)

    # bn1 scale folded into w1; bias (bn1 shift) + additive pad-kill mask folded into
    # the ReLU: nmask is 0 at valid columns, -1e30 at inter-sample gap columns, so the
    # ReLU emits exact zeros there (conv2's shifted taps then see zero boundaries).
    h = jnp.maximum(h + b1_ref[...] + nmask_ref[...], 0.0)
    hc = h.astype(x.dtype)                                    # one cast before rolling

    # --- conv2 (k=3, pad=1) + 1x1 downsample residual fused into ONE matmul ---
    hs_ref[0:cop, :] = pltpu.roll(hc, shift=1, axis=1)
    hs_ref[cop:2 * cop, :] = hc
    hs_ref[2 * cop:3 * cop, :] = pltpu.roll(hc, shift=tile - 1, axis=1)
    hs_ref[3 * cop:3 * cop + cip, :] = x                      # residual (1x1 downsample)
    y = jnp.dot(w2_ref[...], hs_ref[...], preferred_element_type=jnp.float32)

    # bn2 shift + downsample bias merged into b2; final ReLU also zeroes gap columns so
    # the packed output can be chained directly into another TemporalConv1D block.
    o_ref[...] = jnp.maximum(y + b2_ref[...] + nmask_ref[...], 0.0).astype(o_ref.dtype)


# --------------------------------------------------------------------------------------
# Host-side helpers
# --------------------------------------------------------------------------------------
def _round_up(v, m):
    return ((v + m - 1) // m) * m


def _tpu_info():
    """(vmem_capacity_bytes, tensorcores_per_chip) with conservative fallbacks."""
    vmem = 64 << 20          # conservative default: v7x per-TC VMEM
    cores = 1                # conservative default: single TC (v5e/v6e)
    try:
        info = pltpu.get_tpu_info()
        v = getattr(info, "vmem_capacity_bytes", None)
        if isinstance(v, int) and v > 0:
            vmem = v
        for name in ("num_cores", "core_count", "num_tensorcores", "tensor_core_count",
                     "cores_per_chip"):
            c = getattr(info, name, None)
            if isinstance(c, int) and c > 0:
                cores = c
                break
    except Exception:
        pass
    return vmem, cores


def _choose_packing(N, L, max_lanes, min_tiles):
    """Pick samples-per-tile (spt) and per-sample stride Ls = L + gap (gap >= 1 zero
    columns between samples) so that TILE = spt * Ls is a multiple of 128, fits in
    max_lanes, and lane waste (gaps + padded samples) is minimised."""
    best = None
    spt_cap = max(1, min(N, max_lanes // (L + 1)))
    if min_tiles > 1:
        spt_cap = max(1, min(spt_cap, -(-N // min_tiles)))    # keep >= min_tiles steps
    for spt in range(spt_cap, 0, -1):
        m = 128 // math.gcd(spt, 128)
        gap = (-L) % m
        if gap == 0:
            gap = m                                           # always >= 1 zero column
        ls = L + gap
        tile = spt * ls
        if tile > max_lanes and spt > 1:
            continue
        n_pad = _round_up(N, spt)
        frac = (N * L) / (n_pad * ls)                          # useful-lane fraction
        key = (frac, tile)
        if best is None or key > (best[0], best[1]):
            best = (frac, tile, spt, ls)
    return best[2], best[3]


def fold_params(w1, w2, wd, bd, bn1, bn2, eps=1e-5, masked=False,
                compute_dtype=jnp.bfloat16):
    """Fold eval-mode BatchNorm into the conv weights and merge the biases (in f32,
    before any low-precision cast); build the packed MXU operands.  Do this once per
    layer, not per forward call."""
    f32 = jnp.float32
    C_out, C_in, _ = w1.shape

    if masked:
        # MaskedConv1D, k=3: taps k < ceil(3/2)=2 survive -> zero tap k=2.
        # k=1 downsample: mask is all-ones -> unchanged.
        keep = (jnp.arange(3) < 2).astype(f32)
        w1 = w1.astype(f32) * keep
        w2 = w2.astype(f32) * keep

    def fold(bn):
        scale = bn["gamma"].astype(f32) * lax.rsqrt(bn["var"].astype(f32) + eps)
        shift = bn["beta"].astype(f32) - bn["mean"].astype(f32) * scale
        return scale, shift

    s1, t1 = fold(bn1)
    s2, t2 = fold(bn2)
    w1f = w1.astype(f32) * s1[:, None, None]
    w2f = w2.astype(f32) * s2[:, None, None]
    b1 = t1                                    # conv1 bias  (= bn1 shift)
    b2 = t2 + bd.astype(f32)                   # bn2 shift + downsample bias, merged

    cdt = jnp.dtype(compute_dtype)
    cmult = 16 if cdt.itemsize == 2 else 8
    Cip = _round_up(C_in, cmult)
    Cop = _round_up(C_out, cmult)

    # conv1 weight -> (Cop, 3*Cip), tap-major blocks matching [x[t-1]; x[t]; x[t+1]]
    w1p = jnp.pad(w1f, ((0, Cop - C_out), (0, Cip - C_in), (0, 0)))
    W1 = jnp.transpose(w1p, (0, 2, 1)).reshape(Cop, 3 * Cip).astype(cdt)
    # conv2 weight + downsample 1x1 weight -> single (Cop, 3*Cop + Cip) operand
    w2p = jnp.pad(w2f, ((0, Cop - C_out), (0, Cop - C_out), (0, 0)))
    W2 = jnp.transpose(w2p, (0, 2, 1)).reshape(Cop, 3 * Cop)
    wdp = jnp.pad(wd.astype(f32), ((0, Cop - C_out), (0, Cip - C_in)))
    W2cat = jnp.concatenate([W2, wdp], axis=1).astype(cdt)

    b1p = jnp.pad(b1, (0, Cop - C_out)).reshape(Cop, 1).astype(f32)
    b2p = jnp.pad(b2, (0, Cop - C_out)).reshape(Cop, 1).astype(f32)

    return dict(W1=W1, W2cat=W2cat, b1=b1p, b2=b2p,
                C_in=C_in, C_out=C_out, Cip=Cip, Cop=Cop, compute_dtype=cdt)


def temporal_conv1d_packed(x_packed, params, spt, Ls, L, out_dtype=None):
    """Fused block on an already packed operand.

    x_packed : (Cip, num_tiles * spt * Ls) in the compute dtype; each sample occupies
    Ls columns (L valid + >=1 zero gap).  The packed output keeps exact zeros in the
    gap columns, so it can be fed directly into another TemporalConv1D block using the
    same packing (pack once per network when stacking layers)."""
    Cip, total = x_packed.shape
    Cop = params["Cop"]
    cdt = params["compute_dtype"]
    odt = cdt if out_dtype is None else jnp.dtype(out_dtype)
    TILE = spt * Ls
    num_tiles = total // TILE

    # additive pad-column mask folded into the ReLUs (identical for every tile)
    col = jnp.arange(TILE, dtype=jnp.int32) % Ls
    nmask = jnp.where(col < L, 0.0, -1e30).astype(jnp.float32).reshape(1, TILE)

    W1, W2cat, b1, b2 = params["W1"], params["W2cat"], params["b1"], params["b2"]
    full = lambda arr: pl.BlockSpec(arr.shape, lambda t: (0,) * arr.ndim)

    flops = int(2 * total * (Cop * 3 * Cip + Cop * (3 * Cop + Cip)))
    bytes_accessed = int(x_packed.size * x_packed.dtype.itemsize
                         + W1.size * W1.dtype.itemsize
                         + W2cat.size * W2cat.dtype.itemsize
                         + Cop * total * odt.itemsize)

    vmem_bytes, _ = _tpu_info()

    return pl.pallas_call(
        temporal_conv1d_kernel,
        out_shape=jax.ShapeDtypeStruct((Cop, total), odt),
        grid_spec=pltpu.PrefetchScalarGridSpec(
            num_scalar_prefetch=0,
            grid=(num_tiles,),
            in_specs=[
                pl.BlockSpec((Cip, TILE), lambda t: (0, t)),   # packed x
                full(W1), full(b1), full(W2cat), full(b2), full(nmask),
            ],
            out_specs=pl.BlockSpec((Cop, TILE), lambda t: (0, t)),
            scratch_shapes=[
                pltpu.VMEM((3 * Cip, TILE), cdt),              # stacked conv1 operand
                pltpu.VMEM((3 * Cop + Cip, TILE), cdt),        # stacked conv2+residual
            ],
        ),
        compiler_params=pltpu.CompilerParams(
            dimension_semantics=("parallel",),
            vmem_limit_bytes=int(vmem_bytes * 3 // 4)),
        cost_estimate=pl.CostEstimate(flops=flops, transcendentals=0,
                                      bytes_accessed=bytes_accessed),
    )(x_packed, W1, b1, W2cat, b2, nmask)


def temporal_conv1d(x, w1, w2, wd, bd, bn1, bn2, eps=1e-5,
                    compute_dtype=jnp.bfloat16, out_dtype=None, masked=False):
    """Fused TemporalConv1D forward (eval-mode BatchNorm), NCL in / NCL out.

    x : (N, C_in, L); w1: (C_out, C_in, 3); w2: (C_out, C_out, 3);
    wd: (C_out, C_in); bd: (C_out,); bn*: dict(gamma, beta, mean, var).
    """
    N, C_in, L = x.shape
    params = fold_params(w1, w2, wd, bd, bn1, bn2, eps=eps, masked=masked,
                         compute_dtype=compute_dtype)
    Cip, Cop, C_out = params["Cip"], params["Cop"], params["C_out"]
    cdt = params["compute_dtype"]
    odt = cdt if out_dtype is None else jnp.dtype(out_dtype)

    # ---- size the tile against the actual VMEM (double-buffered in/out blocks,
    #      staged operands, f32 intermediates) and the TensorCore count ----
    vmem_bytes, num_cores = _tpu_info()
    per_lane = (2 * Cip * cdt.itemsize                 # x block, double-buffered
                + 2 * Cop * odt.itemsize               # out block, double-buffered
                + 3 * Cip * cdt.itemsize               # xs scratch
                + (3 * Cop + Cip) * cdt.itemsize       # hs scratch
                + 3 * Cop * 4)                         # f32 h + rolled-copy headroom
    weight_bytes = (params["W1"].size + params["W2cat"].size) * cdt.itemsize * 2
    budget = vmem_bytes // 2
    max_lanes = max(128, (budget - weight_bytes) // per_lane)
    max_lanes = max(128, (min(max_lanes, 8192) // 128) * 128)

    # only force >=2 grid steps when the chip actually has >=2 TensorCores (v7x)
    min_tiles = 2 if (num_cores >= 2 and N >= 2) else 1
    spt, Ls = _choose_packing(N, L, max_lanes, min_tiles)
    Np = _round_up(N, spt)

    # ---- pack: (N, C_in, L) -> (Cip, Np*Ls), >=1 zero gap column between samples ----
    xp = jnp.pad(x.astype(cdt), ((0, Np - N), (0, Cip - C_in), (0, Ls - L)))
    x_packed = jnp.transpose(xp, (1, 0, 2)).reshape(Cip, Np * Ls)

    out2d = temporal_conv1d_packed(x_packed, params, spt, Ls, L, out_dtype=odt)

    # ---- unpack: (Cop, Np*Ls) -> (N, C_out, L), stripping channel/gap/sample padding
    out = out2d.reshape(Cop, Np, Ls).transpose(1, 0, 2)[:N, :C_out, :L]
    return out


# --------------------------------------------------------------------------------------
# Pure-JAX reference (matches the PyTorch eval-mode forward)
# --------------------------------------------------------------------------------------
def reference(x, w1, w2, wd, bd, bn1, bn2, eps=1e-5, masked=False):
    if masked:
        keep = (jnp.arange(3) < 2).astype(x.dtype)
        w1 = w1 * keep
        w2 = w2 * keep

    def conv1d(x, w, pad):
        return lax.conv_general_dilated(
            x, w, window_strides=(1,), padding=[(pad, pad)],
            dimension_numbers=("NCH", "OIH", "NCH"))

    def bn(h, p):
        sc = p["gamma"] * lax.rsqrt(p["var"] + eps)
        sh = p["beta"] - p["mean"] * sc
        return h * sc[None, :, None] + sh[None, :, None]

    h = jnp.maximum(bn(conv1d(x, w1, 1), bn1), 0.0)
    h = bn(conv1d(h, w2, 1), bn2)
    res = conv1d(x, wd[:, :, None], 0) + bd[None, :, None]
    return jnp.maximum(h + res, 0.0)


if __name__ == "__main__":
    N, C_in, C_out, L = 2, 4, 8, 16
    key = jax.random.PRNGKey(0)
    ks = jax.random.split(key, 10)

    x = jax.random.normal(ks[0], (N, C_in, L), jnp.float32)
    w1 = jax.random.normal(ks[1], (C_out, C_in, 3), jnp.float32) * 0.3
    w2 = jax.random.normal(ks[2], (C_out, C_out, 3), jnp.float32) * 0.3
    wd = jax.random.normal(ks[3], (C_out, C_in), jnp.float32) * 0.3
    bd = jax.random.normal(ks[4], (C_out,), jnp.float32) * 0.1

    bn1 = dict(gamma=jax.random.uniform(ks[5], (C_out,), minval=0.5, maxval=1.5),
               beta=jax.random.normal(ks[6], (C_out,)) * 0.1,
               mean=jax.random.normal(ks[7], (C_out,)) * 0.1,
               var=jax.random.uniform(ks[8], (C_out,), minval=0.5, maxval=1.5))
    bn2 = dict(gamma=jnp.ones((C_out,)), beta=jnp.zeros((C_out,)),
               mean=jax.random.normal(ks[9], (C_out,)) * 0.1,
               var=jnp.ones((C_out,)) * 1.2)

    ref = jax.block_until_ready(reference(x, w1, w2, wd, bd, bn1, bn2))

    # f32 operands + f32 output: tight check against the pure-JAX reference
    out_f32 = jax.block_until_ready(
        temporal_conv1d(x, w1, w2, wd, bd, bn1, bn2,
                        compute_dtype=jnp.float32, out_dtype=jnp.float32))
    assert out_f32.shape == (N, C_out, L), out_f32.shape
    assert jnp.allclose(out_f32, ref, atol=1e-4, rtol=1e-4), \
        float(jnp.max(jnp.abs(out_f32 - ref)))

    # masked=True (MaskedConv1D) path, f32: tight check
    ref_m = jax.block_until_ready(reference(x, w1, w2, wd, bd, bn1, bn2, masked=True))
    out_m = jax.block_until_ready(
        temporal_conv1d(x, w1, w2, wd, bd, bn1, bn2, masked=True,
                        compute_dtype=jnp.float32, out_dtype=jnp.float32))
    assert jnp.allclose(out_m, ref_m, atol=1e-4, rtol=1e-4), \
        float(jnp.max(jnp.abs(out_m - ref_m)))

    # bf16 MXU operands, bf16 output (f32 accumulation / epilogue): loose check
    out_bf16 = jax.block_until_ready(
        temporal_conv1d(x, w1, w2, wd, bd, bn1, bn2, compute_dtype=jnp.bfloat16))
    assert out_bf16.shape == (N, C_out, L), out_bf16.shape
    assert out_bf16.dtype == jnp.bfloat16
    assert jnp.allclose(out_bf16.astype(jnp.float32), ref, atol=2e-1, rtol=1e-1), \
        float(jnp.max(jnp.abs(out_bf16.astype(jnp.float32) - ref)))

    print("KERNEL_OK")
</pallas_src>

<mosaic_0001>
module attributes {stable_mosaic.version = 11 : i64} {
  func.func @temporal_conv1d_kernel(%arg0: i32, %arg1: memref<8x128xf32, #tpu.memory_space<vmem>>, %arg2: memref<8x24xf32, #tpu.memory_space<vmem>>, %arg3: memref<8x1xf32, #tpu.memory_space<vmem>>, %arg4: memref<8x32xf32, #tpu.memory_space<vmem>>, %arg5: memref<8x1xf32, #tpu.memory_space<vmem>>, %arg6: memref<1x128xf32, #tpu.memory_space<vmem>>, %arg7: memref<8x128xf32, #tpu.memory_space<vmem>>, %arg8: memref<24x128xf32, #tpu.memory_space<vmem>>, %arg9: memref<32x128xf32, #tpu.memory_space<vmem>>) attributes {dimension_semantics = [#tpu.dimension_semantics<parallel>], iteration_bounds = array<i64: 1>, scalar_prefetch = 0 : i64, scratch_operands = 2 : i64, tpu.core_type = #tpu.core_type<tc>, window_params = [{transform_indices = @transform_0, window_bounds = array<i64: 8, 128>}, {pipeline_mode = #tpu.pipeline_mode<synchronous>, transform_indices = @transform_1, window_bounds = array<i64: 8, 24>}, {pipeline_mode = #tpu.pipeline_mode<synchronous>, transform_indices = @transform_2, window_bounds = array<i64: 8, 1>}, {pipeline_mode = #tpu.pipeline_mode<synchronous>, transform_indices = @transform_3, window_bounds = array<i64: 8, 32>}, {pipeline_mode = #tpu.pipeline_mode<synchronous>, transform_indices = @transform_4, window_bounds = array<i64: 8, 1>}, {pipeline_mode = #tpu.pipeline_mode<synchronous>, transform_indices = @transform_5, window_bounds = array<i64: 1, 128>}, {transform_indices = @transform_6, window_bounds = array<i64: 8, 128>}]} {
    %c0 = arith.constant 0 : index
    %c0_0 = arith.constant 0 : index
    %0 = vector.load %arg1[%c0, %c0_0] : memref<8x128xf32, #tpu.memory_space<vmem>>, vector<8x128xf32>
    %c1_i32 = arith.constant 1 : i32
    %1 = tpu.dynamic_rotate %0 by %c1_i32 dim 1 : vector<8x128xf32>, i32 -> vector<8x128xf32>
    %c0_1 = arith.constant 0 : index
    %c0_2 = arith.constant 0 : index
    %2 = vector.load %arg8[%c0_1, %c0_2] : memref<24x128xf32, #tpu.memory_space<vmem>>, vector<8x128xf32>
    tpu.vector_store %arg8[%c0_1, %c0_2], %1 {strides = array<i32>} : memref<24x128xf32, #tpu.memory_space<vmem>>, vector<8x128xf32>,
    %c8 = arith.constant 8 : index
    %c0_3 = arith.constant 0 : index
    %3 = vector.load %arg8[%c8, %c0_3] : memref<24x128xf32, #tpu.memory_space<vmem>>, vector<8x128xf32>
    tpu.vector_store %arg8[%c8, %c0_3], %0 {strides = array<i32>} : memref<24x128xf32, #tpu.memory_space<vmem>>, vector<8x128xf32>,
    %c127_i32 = arith.constant 127 : i32
    %4 = tpu.dynamic_rotate %0 by %c127_i32 dim 1 : vector<8x128xf32>, i32 -> vector<8x128xf32>
    %c16 = arith.constant 16 : index
    %c0_4 = arith.constant 0 : index
    %5 = vector.load %arg8[%c16, %c0_4] : memref<24x128xf32, #tpu.memory_space<vmem>>, vector<8x128xf32>
    tpu.vector_store %arg8[%c16, %c0_4], %4 {strides = array<i32>} : memref<24x128xf32, #tpu.memory_space<vmem>>, vector<8x128xf32>,
    %c0_5 = arith.constant 0 : index
    %c0_6 = arith.constant 0 : index
    %6 = vector.load %arg2[%c0_5, %c0_6] : memref<8x24xf32, #tpu.memory_space<vmem>>, vector<8x24xf32>
    %c0_7 = arith.constant 0 : index
    %c0_8 = arith.constant 0 : index
    %7 = vector.load %arg8[%c0_7, %c0_8] : memref<24x128xf32, #tpu.memory_space<vmem>>, vector<24x128xf32>
    %cst = arith.constant dense<0.000000e+00> : vector<8x128xf32>
    %8 = tpu.matmul %6, %7, %cst {dimension_numbers = #tpu.dot_dimension_numbers<[1], [0], [0], [1], [0, 0, 1, 1], [], []>} : vector<8x24xf32>, vector<24x128xf32>, vector<8x128xf32> -> vector<8x128xf32>
    %c0_9 = arith.constant 0 : index
    %c0_10 = arith.constant 0 : index
    %9 = vector.load %arg3[%c0_9, %c0_10] : memref<8x1xf32, #tpu.memory_space<vmem>>, vector<8x1xf32>
    %10 = vector.broadcast %9 : vector<8x1xf32> to vector<8x128xf32>
    %11 = arith.addf %8, %10 : vector<8x128xf32>
    %c0_11 = arith.constant 0 : index
    %c0_12 = arith.constant 0 : index
    %12 = vector.load %arg6[%c0_11, %c0_12] : memref<1x128xf32, #tpu.memory_space<vmem>>, vector<1x128xf32>
    %13 = vector.broadcast %12 : vector<1x128xf32> to vector<8x128xf32>
    %14 = arith.addf %11, %13 : vector<8x128xf32>
    %cst_13 = arith.constant 0.000000e+00 : f32
    %15 = vector.broadcast %cst_13 : f32 to vector<8x128xf32>
    %16 = arith.maximumf %14, %15 : vector<8x128xf32>
    %c1_i32_14 = arith.constant 1 : i32
    %17 = tpu.dynamic_rotate %16 by %c1_i32_14 dim 1 : vector<8x128xf32>, i32 -> vector<8x128xf32>
    %c0_15 = arith.constant 0 : index
    %c0_16 = arith.constant 0 : index
    %18 = vector.load %arg9[%c0_15, %c0_16] : memref<32x128xf32, #tpu.memory_space<vmem>>, vector<8x128xf32>
    tpu.vector_store %arg9[%c0_15, %c0_16], %17 {strides = array<i32>} : memref<32x128xf32, #tpu.memory_space<vmem>>, vector<8x128xf32>,
    %c8_17 = arith.constant 8 : index
    %c0_18 = arith.constant 0 : index
    %19 = vector.load %arg9[%c8_17, %c0_18] : memref<32x128xf32, #tpu.memory_space<vmem>>, vector<8x128xf32>
    tpu.vector_store %arg9[%c8_17, %c0_18], %16 {strides = array<i32>} : memref<32x128xf32, #tpu.memory_space<vmem>>, vector<8x128xf32>,
    %c127_i32_19 = arith.constant 127 : i32
    %20 = tpu.dynamic_rotate %16 by %c127_i32_19 dim 1 : vector<8x128xf32>, i32 -> vector<8x128xf32>
    %c16_20 = arith.constant 16 : index
    %c0_21 = arith.constant 0 : index
    %21 = vector.load %arg9[%c16_20, %c0_21] : memref<32x128xf32, #tpu.memory_space<vmem>>, vector<8x128xf32>
    tpu.vector_store %arg9[%c16_20, %c0_21], %20 {strides = array<i32>} : memref<32x128xf32, #tpu.memory_space<vmem>>, vector<8x128xf32>,
    %c24 = arith.constant 24 : index
    %c0_22 = arith.constant 0 : index
    %22 = vector.load %arg9[%c24, %c0_22] : memref<32x128xf32, #tpu.memory_space<vmem>>, vector<8x128xf32>
    tpu.vector_store %arg9[%c24, %c0_22], %0 {strides = array<i32>} : memref<32x128xf32, #tpu.memory_space<vmem>>, vector<8x128xf32>,
    %c0_23 = arith.constant 0 : index
    %c0_24 = arith.constant 0 : index
    %23 = vector.load %arg4[%c0_23, %c0_24] : memref<8x32xf32, #tpu.memory_space<vmem>>, vector<8x32xf32>
    %c0_25 = arith.constant 0 : index
    %c0_26 = arith.constant 0 : index
    %24 = vector.load %arg9[%c0_25, %c0_26] : memref<32x128xf32, #tpu.memory_space<vmem>>, vector<32x128xf32>
    %cst_27 = arith.constant dense<0.000000e+00> : vector<8x128xf32>
    %25 = tpu.matmul %23, %24, %cst_27 {dimension_numbers = #tpu.dot_dimension_numbers<[1], [0], [0], [1], [0, 0, 1, 1], [], []>} : vector<8x32xf32>, vector<32x128xf32>, vector<8x128xf32> -> vector<8x128xf32>
    %c0_28 = arith.constant 0 : index
    %c0_29 = arith.constant 0 : index
    %26 = vector.load %arg5[%c0_28, %c0_29] : memref<8x1xf32, #tpu.memory_space<vmem>>, vector<8x1xf32>
    %27 = vector.broadcast %26 : vector<8x1xf32> to vector<8x128xf32>
    %28 = arith.addf %25, %27 : vector<8x128xf32>
    %c0_30 = arith.constant 0 : index
    %c0_31 = arith.constant 0 : index
    %29 = vector.load %arg6[%c0_30, %c0_31] : memref<1x128xf32, #tpu.memory_space<vmem>>, vector<1x128xf32>
    %30 = vector.broadcast %29 : vector<1x128xf32> to vector<8x128xf32>
    %31 = arith.addf %28, %30 : vector<8x128xf32>
    %cst_32 = arith.constant 0.000000e+00 : f32
    %32 = vector.broadcast %cst_32 : f32 to vector<8x128xf32>
    %33 = arith.maximumf %31, %32 : vector<8x128xf32>
    %c0_33 = arith.constant 0 : index
    %c0_34 = arith.constant 0 : index
    %34 = vector.load %arg7[%c0_33, %c0_34] : memref<8x128xf32, #tpu.memory_space<vmem>>, vector<8x128xf32>
    tpu.vector_store %arg7[%c0_33, %c0_34], %33 {strides = array<i32>} : memref<8x128xf32, #tpu.memory_space<vmem>>, vector<8x128xf32>,
    return
  }
  func.func @transform_0(%arg0: i32) -> (i32, i32) {
    %c0_i32 = arith.constant 0 : i32
    %c0_i32_0 = arith.constant 0 : i32
    return %c0_i32, %arg0 : i32, i32
  }
  func.func @transform_1(%arg0: i32) -> (i32, i32) {
    %c0_i32 = arith.constant 0 : i32
    %c0_i32_0 = arith.constant 0 : i32
    %c0_i32_1 = arith.constant 0 : i32
    return %c0_i32, %c0_i32_0 : i32, i32
  }
  func.func @transform_2(%arg0: i32) -> (i32, i32) {
    %c0_i32 = arith.constant 0 : i32
    %c0_i32_0 = arith.constant 0 : i32
    %c0_i32_1 = arith.constant 0 : i32
    return %c0_i32, %c0_i32_0 : i32, i32
  }
  func.func @transform_3(%arg0: i32) -> (i32, i32) {
    %c0_i32 = arith.constant 0 : i32
    %c0_i32_0 = arith.constant 0 : i32
    %c0_i32_1 = arith.constant 0 : i32
    return %c0_i32, %c0_i32_0 : i32, i32
  }
  func.func @transform_4(%arg0: i32) -> (i32, i32) {
    %c0_i32 = arith.constant 0 : i32
    %c0_i32_0 = arith.constant 0 : i32
    %c0_i32_1 = arith.constant 0 : i32
    return %c0_i32, %c0_i32_0 : i32, i32
  }
  func.func @transform_5(%arg0: i32) -> (i32, i32) {
    %c0_i32 = arith.constant 0 : i32
    %c0_i32_0 = arith.constant 0 : i32
    %c0_i32_1 = arith.constant 0 : i32
    return %c0_i32, %c0_i32_0 : i32, i32
  }
  func.func @transform_6(%arg0: i32) -> (i32, i32) {
    %c0_i32 = arith.constant 0 : i32
    %c0_i32_0 = arith.constant 0 : i32
    return %c0_i32, %arg0 : i32, i32
  }
}

</mosaic_0001>

<llo_original>
// kernel: tpu_custom_call.1
$region0: #{tpu_custom_call.1}
  #allocation0 [shape = 'u32[]', space=smem, size = 0x4, offset = 0x4, fixed_abs, tag = 'smem constant byte address 0x4 - core index']
  #allocation1 [shape = 'u32[144,128]{1,0:T(1,128)}', space=vmem, size = 0x12000, scoped, tag = 'internal scratch']
  #allocation2 [shape = 'f32[24,128]{1,0:T(8,128)}', space=vmem, size = 0x3000, scoped, tag = 'scratch operand']
  #allocation3 [shape = 'f32[32,128]{1,0:T(8,128)}', space=vmem, size = 0x4000, scoped, tag = 'scratch operand']
  %s0 = inlined_call_operand.vmem [shape: f32[8,128], index: 0, kind: input, shape index: {}]
  %s1 = inlined_call_operand.vmem [shape: f32[8,24], index: 1, kind: input, shape index: {}]
  %s2 = inlined_call_operand.vmem [shape: f32[8,1], index: 2, kind: input, shape index: {}]
  %s3 = inlined_call_operand.vmem [shape: f32[8,32], index: 3, kind: input, shape index: {}]
  %s4 = inlined_call_operand.vmem [shape: f32[8,1], index: 4, kind: input, shape index: {}]
  %s5 = inlined_call_operand.vmem [shape: f32[1,128], index: 5, kind: input, shape index: {}]
  %s6 = inlined_call_operand.hbm [shape: f32[8,128], index: 6, kind: output, shape index: {}]
  %s7 = sld [smem:[#allocation0]]
  $region34: #{tpu_custom_call.1} parent=0
    _
  %s9 = ssub.s32 1, %s7
  %s10 = scalar_select 0, %s9, %s7
  $region1: #{tpu_custom_call.1} parent=0
    #allocation4 [shape = 'u8[4096]{0}', space=vmem, size = 0x1000, scoped, tag = 'output window, operand 0, single buffered']
    #allocation5 [shape = 's32[1]{0}', space=sflag, size = 0x4, scoped, tag = 'scoped memory for tpu_custom_call.1']
    %11 = vsyncpa [#allocation5], 0
    // Predicated region
    $region2: #{tpu_custom_call.1} parent=1 // pred_check
      _
    $region3: #{tpu_custom_call.1} parent=1 // pred_check_branch
      %13 = sbr.rel (0) target = $region5
    $region4: #{tpu_custom_call.1} parent=1 // pred_region
      _
    $region5: #{tpu_custom_call.1} parent=1 // pred_fallthru
      _
    // Predicated region
    $region6: #{tpu_custom_call.1} parent=1 // pred_check
      _
    $region7: #{tpu_custom_call.1} parent=1 // pred_check_branch
      %15 = sbr.rel (0) target = $region9
    $region8: #{tpu_custom_call.1} parent=1 // pred_region
      _
    $region9: #{tpu_custom_call.1} parent=1 // pred_fallthru
      _
    // Predicated region
    $region10: #{tpu_custom_call.1} parent=1 // pred_check
      _
    $region11: #{tpu_custom_call.1} parent=1 // pred_check_branch
      %17 = sbr.rel (0) target = $region13
    $region12: #{tpu_custom_call.1} parent=1 // pred_region
      _
    $region13: #{tpu_custom_call.1} parent=1 // pred_fallthru
      _
    // Predicated region
    $region14: #{tpu_custom_call.1} parent=1 // pred_check
      _
    $region15: #{tpu_custom_call.1} parent=1 // pred_check_branch
      %19 = sbr.rel (0) target = $region17
    $region16: #{tpu_custom_call.1} parent=1 // pred_region
      _
    $region17: #{tpu_custom_call.1} parent=1 // pred_fallthru
      _
    // Predicated region
    $region18: #{tpu_custom_call.1} parent=1 // pred_check
      _
    $region19: #{tpu_custom_call.1} parent=1 // pred_check_branch
      %21 = sbr.rel (0) target = $region21
    $region20: #{tpu_custom_call.1} parent=1 // pred_region
      _
    $region21: #{tpu_custom_call.1} parent=1 // pred_fallthru
      _
    // Predicated region
    $region22: #{tpu_custom_call.1} parent=1 // pred_check
      _
    $region23: #{tpu_custom_call.1} parent=1 // pred_check_branch
      %23 = sbr.rel (0) target = $region25
    $region24: #{tpu_custom_call.1} parent=1 // pred_region
      _
    $region25: #{tpu_custom_call.1} parent=1 // pred_fallthru
      _
    %v24 = vld [vmem:[%s0] sm:$0xff]
    %25 = vrot.lane.b32.xlu0 %v24, 1
    %v26 = vpop.permute.xlu0 %25
    %27 = vst [vmem:[#allocation2] sm:$0xff] %v26
    %28 = vst [vmem:[#allocation2 + $0x8] sm:$0xff] %v24
    %29 = vrot.lane.b32.xlu0 %v24, 127
    %v30 = vpop.permute.xlu0 %29
    %31 = vst [vmem:[#allocation2 + $0x10] sm:$0xff] %v30
    %v32 = vld [vmem:[%s1] sm:$0xff]
    %v33 = vld [vmem:[#allocation2] sm:$0xff]
    %v34 = vld [vmem:[#allocation2 + $0x8] sm:$0xff]
    %v35 = vld [vmem:[#allocation2 + $0x10] sm:$0xff]
    %v36 = vld [vmem:[%s2] sm:$0xff]
    %38 = vset.pattern.permute.xlu0 0
    %39 = vperm.xlu0 %38, %v36
    %v40 = vpop.permute.xlu0 %39
    %vm42 = vcmask 195584
    %v44 = vsel %vm42, %v32, 0
    %46 = vmatprep.subr.mxu0 0.0
    %47 = vmatpush1.msra.mxu0 %v33
    %48 = vmatprep.subr.mxu0 0.0
    %49 = vmatpush1.msra.mxu0 %v34
    %50 = vmatprep.subr.mxu0 0.0
    %51 = vmatpush1.msra.mxu0 %v35
    %52 = vmatprep.subr.mxu0 0.0
    %53 = vmatpush1.msra.mxu0 0.0
    %54 = vmatprep.subr.mxu0 0.0
    %55 = vmatpush1.msra.mxu0 0.0
    %56 = vmatprep.subr.mxu0 0.0
    %57 = vmatpush1.msra.mxu0 0.0
    %58 = vmatprep.subr.mxu0 0.0
    %59 = vmatpush1.msra.mxu0 0.0
    %60 = vmatprep.subr.mxu0 0.0
    %61 = vmatpush1.msra.mxu0 0.0
    %62 = vmatprep.subr.mxu0 0.0
    %63 = vmatpush1.msra.mxu0 0.0
    %64 = vmatprep.subr.mxu0 0.0
    %65 = vmatpush1.msra.mxu0 0.0
    %66 = vmatprep.subr.mxu0 0.0
    %67 = vmatpush1.msra.mxu0 0.0
    %68 = vmatprep.subr.mxu0 0.0
    %69 = vmatpush1.msra.mxu0 0.0
    %70 = vmatprep.subr.mxu0 0.0
    %71 = vmatpush1.msra.mxu0 0.0
    %72 = vmatprep.subr.mxu0 0.0
    %73 = vmatpush1.msra.mxu0 0.0
    %74 = vmatprep.subr.mxu0 0.0
    %75 = vmatpush1.msra.mxu0 0.0
    %76 = vmatprep.subr.mxu0 0.0
    %77 = vmatpush1.msra.mxu0 0.0
    %78 = vmatprep.subr.mxu0 0.0
    %79 = vmatpush1.msra.mxu0 0.0
    %80 = vmatprep.subr.mxu0 0.0
    %81 = vmatpush1.msra.mxu0 0.0
    %82 = vmatprep.subr.mxu0 0.0
    %83 = vmatpush1.msra.mxu0 0.0
    %84 = vmatprep.subr.mxu0 0.0
    %85 = vmatpush1.msra.mxu0 0.0
    %86 = vmatprep.subr.mxu0 0.0
    %87 = vmatpush1.msra.mxu0 0.0
    %88 = vmatprep.subr.mxu0 0.0
    %89 = vmatpush1.msra.mxu0 0.0
    %90 = vmatprep.subr.mxu0 0.0
    %91 = vmatpush1.msra.mxu0 0.0
    %92 = vmatprep.subr.mxu0 0.0
    %93 = vmatpush1.msra.mxu0 0.0
    %94 = vmatprep.subr.mxu0 0.0
    %95 = vmatpush1.msra.mxu0 0.0
    %96 = vmatprep.subr.mxu0 0.0
    %97 = vmatpush1.msra.mxu0 0.0
    %98 = vmatprep.subr.mxu0 0.0
    %99 = vmatpush1.msra.mxu0 0.0
    %100 = vmatprep.subr.mxu0 0.0
    %101 = vmatpush1.msra.mxu0 0.0
    %102 = vmatprep.subr.mxu0 0.0
    %103 = vmatpush1.msra.mxu0 0.0
    %104 = vmatprep.subr.mxu0 0.0
    %105 = vmatpush1.msra.mxu0 0.0
    %106 = vmatprep.subr.mxu0 0.0
    %107 = vmatpush1.msra.mxu0 0.0
    %108 = vmatprep.subr.mxu0 0.0
    %109 = vmatpush1.msra.mxu0 0.0
    %110 = vmatprep.mubr.f32.mxu0 0.0
    %111 = vmatmul.mubr.f32.gmra.mrb[0].mxu0 %v44
    %v112 = vpop.f32.mrb[0].mxu0
    %v113 = vadd.f32 %v40, %v112
    %v114 = vpop.f32.mrb[0].mxu0
    %115 = vdwg.mxu0
    %v116 = vld [vmem:[%s5] sm:$0x1]
    %v118 = vlaneseq
    %v119 = vshrl.u32 %v118, 7
    %v120 = vsub.s32 0, %v119
    %v121 = vrot.slane %v116, %v120
    %v123 = vadd.f32 %v113, %v121
    %v124 = vmax.f32 %v123, 0.0
    %125 = vrot.lane.b32.xlu0 %v124, 1
    %v126 = vpop.permute.xlu0 %125
    %127 = vst [vmem:[#allocation3] sm:$0xff] %v126
    %128 = vst [vmem:[#allocation3 + $0x8] sm:$0xff] %v124
    %129 = vrot.lane.b32.xlu0 %v124, 127
    %v130 = vpop.permute.xlu0 %129
    %131 = vst [vmem:[#allocation3 + $0x10] sm:$0xff] %v130
    %132 = vst [vmem:[#allocation3 + $0x18] sm:$0xff] %v24
    %v133 = vld [vmem:[%s3] sm:$0xff]
    %v134 = vld [vmem:[#allocation3] sm:$0xff]
    %v135 = vld [vmem:[#allocation3 + $0x8] sm:$0xff]
    %v136 = vld [vmem:[#allocation3 + $0x10] sm:$0xff]
    %v137 = vld [vmem:[#allocation3 + $0x18] sm:$0xff]
    %v138 = vld [vmem:[%s4] sm:$0xff]
    %140 = vset.pattern.permute.xlu0 0
    %141 = vperm.xlu0 %140, %v138
    %v142 = vpop.permute.xlu0 %141
    %vm144 = vcmask 261120
    %v146 = vsel %vm144, %v133, 0
    %148 = vmatprep.subr.mxu0 0.0
    %149 = vmatpush1.msra.mxu0 %v134
    %150 = vmatprep.subr.mxu0 0.0
    %151 = vmatpush1.msra.mxu0 %v135
    %152 = vmatprep.subr.mxu0 0.0
    %153 = vmatpush1.msra.mxu0 %v136
    %154 = vmatprep.subr.mxu0 0.0
    %155 = vmatpush1.msra.mxu0 %v137
    %156 = vmatprep.subr.mxu0 0.0
    %157 = vmatpush1.msra.mxu0 0.0
    %158 = vmatprep.subr.mxu0 0.0
    %159 = vmatpush1.msra.mxu0 0.0
    %160 = vmatprep.subr.mxu0 0.0
    %161 = vmatpush1.msra.mxu0 0.0
    %162 = vmatprep.subr.mxu0 0.0
    %163 = vmatpush1.msra.mxu0 0.0
    %164 = vmatprep.subr.mxu0 0.0
    %165 = vmatpush1.msra.mxu0 0.0
    %166 = vmatprep.subr.mxu0 0.0
    %167 = vmatpush1.msra.mxu0 0.0
    %168 = vmatprep.subr.mxu0 0.0
    %169 = vmatpush1.msra.mxu0 0.0
    %170 = vmatprep.subr.mxu0 0.0
    %171 = vmatpush1.msra.mxu0 0.0
    %172 = vmatprep.subr.mxu0 0.0
    %173 = vmatpush1.msra.mxu0 0.0
    %174 = vmatprep.subr.mxu0 0.0
    %175 = vmatpush1.msra.mxu0 0.0
    %176 = vmatprep.subr.mxu0 0.0
    %177 = vmatpush1.msra.mxu0 0.0
    %178 = vmatprep.subr.mxu0 0.0
    %179 = vmatpush1.msra.mxu0 0.0
    %180 = vmatprep.subr.mxu0 0.0
    %181 = vmatpush1.msra.mxu0 0.0
    %182 = vmatprep.subr.mxu0 0.0
    %183 = vmatpush1.msra.mxu0 0.0
    %184 = vmatprep.subr.mxu0 0.0
    %185 = vmatpush1.msra.mxu0 0.0
    %186 = vmatprep.subr.mxu0 0.0
    %187 = vmatpush1.msra.mxu0 0.0
    %188 = vmatprep.subr.mxu0 0.0
    %189 = vmatpush1.msra.mxu0 0.0
    %190 = vmatprep.subr.mxu0 0.0
    %191 = vmatpush1.msra.mxu0 0.0
    %192 = vmatprep.subr.mxu0 0.0
    %193 = vmatpush1.msra.mxu0 0.0
    %194 = vmatprep.subr.mxu0 0.0
    %195 = vmatpush1.msra.mxu0 0.0
    %196 = vmatprep.subr.mxu0 0.0
    %197 = vmatpush1.msra.mxu0 0.0
    %198 = vmatprep.subr.mxu0 0.0
    %199 = vmatpush1.msra.mxu0 0.0
    %200 = vmatprep.subr.mxu0 0.0
    %201 = vmatpush1.msra.mxu0 0.0
    %202 = vmatprep.subr.mxu0 0.0
    %203 = vmatpush1.msra.mxu0 0.0
    %204 = vmatprep.subr.mxu0 0.0
    %205 = vmatpush1.msra.mxu0 0.0
    %206 = vmatprep.subr.mxu0 0.0
    %207 = vmatpush1.msra.mxu0 0.0
    %208 = vmatprep.subr.mxu0 0.0
    %209 = vmatpush1.msra.mxu0 0.0
    %210 = vmatprep.subr.mxu0 0.0
    %211 = vmatpush1.msra.mxu0 0.0
    %212 = vmatprep.mubr.f32.mxu0 0.0
    %213 = vmatmul.mubr.f32.gmra.mrb[0].mxu0 %v146
    %v214 = vpop.f32.mrb[0].mxu0
    %v215 = vadd.f32 %v142, %v214
    %v216 = vpop.f32.mrb[0].mxu0
    %217 = vdwg.mxu0
    %v218 = vld [vmem:[%s5] sm:$0x1]
    %v220 = vlaneseq
    %v221 = vshrl.u32 %v220, 7
    %v222 = vsub.s32 0, %v221
    %v223 = vrot.slane %v218, %v222
    %v225 = vadd.f32 %v215, %v223
    %v226 = vmax.f32 %v225, 0.0
    %227 = vst [vmem:[#allocation4] sm:$0xff] %v226
    // Predicated region
    $region26: #{tpu_custom_call.1} parent=1 // pred_check
      _
    $region27: #{tpu_custom_call.1} parent=1 // pred_check_branch
      %229 = sbr.rel (0) target = $region29
    $region28: #{tpu_custom_call.1} parent=1 // pred_region
      %s231 = ssub.s32 128, 128
      %232 = vsyncadd [#allocation5], %s231
      %s234 = sshll.u32 [#allocation4], 4
      %s235 = int_to_ptr.vmem [resolvable:$true] %s234
      %237 = dma.vmem_to_hbm [thread:$0]  %s235, 128, %s6, [#allocation5]
    $region29: #{tpu_custom_call.1} parent=1 // pred_fallthru
      _
    // Predicated region
    $region30: #{tpu_custom_call.1} parent=1 // pred_check
      _
    $region31: #{tpu_custom_call.1} parent=1 // pred_check_branch
      %239 = sbr.rel (0) target = $region33
    $region32: #{tpu_custom_call.1} parent=1 // pred_region
      %240 = dma.done [#allocation5], 128
    $region33: #{tpu_custom_call.1} parent=1 // pred_fallthru
      _
    %241 = vsyncpa [#allocation5], 1

</llo_original>
